<compile_context>
chip_gen: v5e
topology: v5e:2x2
jax: 0.10.0
libtpu: 0.0.40
codegen_flags: <defaults>
</compile_context>

<pallas_src>
import functools

import jax
import jax.numpy as jnp
from jax.experimental import pallas as pl
from jax.experimental.pallas import tpu as pltpu

LRELU_SLOPE = 0.01            # PyTorch LeakyReLU default negative_slope
BN_EPS = 1e-5
MATMUL_DTYPE = jnp.bfloat16   # MXU-native; accumulation stays fp32
MAX_M_TILE = 2048             # lane-axis tile for conv GEMMs (v7x-safe VMEM)
MAX_TAIL_LANES = 8192         # lane-axis tile for the elementwise SE tail


def _round_up(x, m):
    return (x + m - 1) // m * m


def _choose_m_tiling(M):
    """Pick the lane tile FIRST, then pad M up to a multiple of it (pl.cdiv).

    Keeps >= 2 grid steps whenever M allows it so v7x's two TensorCores both
    get work; never silently falls back to tiny 128-wide tiles for large M."""
    m128 = _round_up(M, 128)
    if m128 <= 128:
        return 128, 128
    if m128 <= 2 * MAX_M_TILE:
        tm = _round_up(pl.cdiv(m128, 2), 128)
    else:
        n_steps = pl.cdiv(m128, MAX_M_TILE)
        tm = _round_up(pl.cdiv(m128, n_steps), 128)
    return tm, pl.cdiv(m128, tm) * tm


# -----------------------------------------------------------------------------
# Pallas kernels
# -----------------------------------------------------------------------------
def _conv_affine_kernel(slope, w_ref, p_ref, b_ref, o_ref):
    """(Cout, TM) = (Cout, K) @ (K, TM) + shift, optional LeakyReLU.

    BN scale is pre-folded into the weights; slope == 1.0 skips the select."""
    acc = jnp.dot(w_ref[...], p_ref[...], preferred_element_type=jnp.float32)
    y = acc + b_ref[...]
    if slope != 1.0:
        y = jnp.where(y >= 0, y, slope * y)
    o_ref[...] = y.astype(o_ref.dtype)


def _conv_fused_tail_kernel(slope, w_ref, p_ref, b_ref, r_ref, s_ref, t_ref, o_ref):
    """conv2 GEMM epilogue fusing the whole SE/residual tail (constant gate).

    gate & bn2 are folded into w/shift at prep time, so:
        v = W@p + shift + res ;  v = LReLU(v) ;  v = v*bn_scale + bn_shift ;
        out = LReLU(v)
    """
    acc = jnp.dot(w_ref[...], p_ref[...], preferred_element_type=jnp.float32)
    v = acc + b_ref[...] + r_ref[...].astype(jnp.float32)
    v = jnp.where(v >= 0, v, slope * v)
    v = v * s_ref[...] + t_ref[...]
    o_ref[...] = jnp.where(v >= 0, v, slope * v).astype(o_ref.dtype)


def conv_gemm(w_mat, patches, shift, *, slope, out_dtype, fused_tail=None):
    """Lane-dense conv GEMM: output (Cout, M) with M on the 128-lane axis."""
    Cout, K = w_mat.shape
    _, M = patches.shape
    tm, m_pad = _choose_m_tiling(M)
    patches = patches.astype(MATMUL_DTYPE)
    if m_pad != M:
        patches = jnp.pad(patches, ((0, 0), (0, m_pad - M)))
    grid = (m_pad // tm,)

    bs_w = pl.BlockSpec((Cout, K), lambda i: (0, 0))     # small, resident
    bs_p = pl.BlockSpec((K, tm), lambda i: (0, i))       # lane-tiled over M
    bs_c = pl.BlockSpec((Cout, 1), lambda i: (0, 0))     # per-channel scalars
    bs_m = pl.BlockSpec((Cout, tm), lambda i: (0, i))    # (Cout, M)-shaped data

    itm = jnp.dtype(MATMUL_DTYPE).itemsize
    bytes_accessed = (m_pad * K + Cout * K) * itm \
        + m_pad * Cout * jnp.dtype(out_dtype).itemsize

    if fused_tail is None:
        kern = functools.partial(_conv_affine_kernel, float(slope))
        in_specs = [bs_w, bs_p, bs_c]
        args = (w_mat, patches, shift)
    else:
        res = fused_tail["res"].astype(MATMUL_DTYPE)
        if m_pad != M:
            res = jnp.pad(res, ((0, 0), (0, m_pad - M)))
        kern = functools.partial(_conv_fused_tail_kernel, float(slope))
        in_specs = [bs_w, bs_p, bs_c, bs_m, bs_c, bs_c]
        args = (w_mat, patches, shift, res,
                fused_tail["bn_scale"], fused_tail["bn_shift"])
        bytes_accessed += m_pad * Cout * itm

    out = pl.pallas_call(
        kern,
        out_shape=jax.ShapeDtypeStruct((Cout, m_pad), out_dtype),
        grid=grid,
        in_specs=in_specs,
        out_specs=bs_m,
        compiler_params=pltpu.CompilerParams(
            dimension_semantics=("parallel",)),           # M tiles across TCs (v7x)
        cost_estimate=pl.CostEstimate(flops=2 * m_pad * K * Cout,
                                      transcendentals=0,
                                      bytes_accessed=int(bytes_accessed)),
    )(*args)
    return out[:, :M] if m_pad != M else out


def _se_tail_kernel(slope, x_ref, g_ref, r_ref, s_ref, t_ref, o_ref):
    """Fused SE gating + residual + LReLU + block BN(eval) + LReLU.

    gate / scale / shift are per-row (tr, 1) and broadcast on the VPU."""
    v = x_ref[...].astype(jnp.float32) * g_ref[...] + r_ref[...].astype(jnp.float32)
    v = jnp.where(v >= 0, v, slope * v)
    v = v * s_ref[...] + t_ref[...]
    o_ref[...] = jnp.where(v >= 0, v, slope * v).astype(o_ref.dtype)


def se_tail(x2d, gate_row, res2d, scale_row, shift_row, out_dtype):
    """x2d/res2d: (R, S) with R = C*N, S = spatial. Per-row factors (R, 1)."""
    R, S = x2d.shape
    ts = S
    if S % 128 == 0 and S > 128:
        for t in (MAX_TAIL_LANES, 4096, 2048, 1024, 512, 256, 128):
            if t <= S and S % t == 0 and S // t >= 2:
                ts = t
                break
    # When S can't be tiled, split rows so both v7x TensorCores get work.
    tr = R // 2 if (ts == S and R % 16 == 0) else R
    grid = (R // tr, S // ts)

    data_spec = pl.BlockSpec((tr, ts), lambda i, j: (i, j))
    row_spec = pl.BlockSpec((tr, 1), lambda i, j: (i, 0))
    cost = pl.CostEstimate(
        flops=6 * R * S, transcendentals=0,
        bytes_accessed=2 * R * S * jnp.dtype(x2d.dtype).itemsize
                       + R * S * jnp.dtype(out_dtype).itemsize)
    kern = functools.partial(_se_tail_kernel, LRELU_SLOPE)
    return pl.pallas_call(
        kern,
        out_shape=jax.ShapeDtypeStruct((R, S), out_dtype),
        grid=grid,
        in_specs=[data_spec, row_spec, data_spec, row_spec, row_spec],
        out_specs=data_spec,
        compiler_params=pltpu.CompilerParams(
            dimension_semantics=("parallel", "parallel")),
        cost_estimate=cost,
    )(x2d, gate_row, res2d, scale_row, shift_row)


# -----------------------------------------------------------------------------
# Glue: patch extraction, blocks, forward
# -----------------------------------------------------------------------------
def conv3d_cn(x_cn, cp, ksize, stride, padding, slope, out_dtype, fused_tail=None):
    """Conv3d (+ folded eval-BN affine, optional LReLU / fused SE tail).

    x_cn: (Cin, N, D, H, W) -> (Cout, N, Do, Ho, Wo)
    cp:   {"w": (Cout, K) bf16 with BN scale pre-multiplied, "shift": (Cout, 1)}
    """
    Cin, N, D, H, W = x_cn.shape
    kd, kh, kw = ksize
    x_cn = x_cn.astype(MATMUL_DTYPE)          # cast at the source (before im2col)
    if (kd, kh, kw) == (1, 1, 1) and stride == 1 and padding == 0:
        patches = x_cn.reshape(Cin, N * D * H * W)
        Do, Ho, Wo = D, H, W
    else:
        # im2col as one XLA data-movement op; K ordered (cin, kd, kh, kw) which
        # matches the flattened PyTorch Conv3d weight (validated in self-check).
        patches = jax.lax.conv_general_dilated_patches(
            x_cn,
            filter_shape=(kd, kh, kw),
            window_strides=(stride, stride, stride),
            padding=((padding, padding),) * 3,
            dimension_numbers=("CNDHW", "OIDHW", "CNDHW"),
        )
        K, _, Do, Ho, Wo = patches.shape
        patches = patches.reshape(K, N * Do * Ho * Wo)
    out = conv_gemm(cp["w"], patches, cp["shift"], slope=slope,
                    out_dtype=out_dtype, fused_tail=fused_tail)
    Cout = cp["w"].shape[0]
    return out.reshape(Cout, N, Do, Ho, Wo)


def block_with_se(x_cn, bp, ksize, stride, padding):
    """Sequential(Conv3d, SEResNetBlock, BatchNorm3d, LeakyReLU)."""
    # Leading conv: bias only, no activation; bf16 output feeds conv1 + residual.
    h = conv3d_cn(x_cn, bp["conv"], ksize, stride, padding,
                  slope=1.0, out_dtype=MATMUL_DTYPE)
    se = bp["se"]
    # conv1 + bn1 + LReLU
    h1 = conv3d_cn(h, se["conv1"], (3, 3, 3), 1, 1,
                   slope=LRELU_SLOPE, out_dtype=MATMUL_DTYPE)

    C, N, D, H, W = h.shape
    M = N * D * H * W

    if "fc1_w" not in se:
        # C // 16 == 0 -> SE gate = sigmoid(fc2_bias) is input independent and
        # already folded into the conv2 weights/shift. The whole tail
        # (gate*h2 + res, LReLU, block BN, LReLU) runs in the conv2 epilogue,
        # so h2 never round-trips through HBM and there is no tail launch.
        out = conv3d_cn(h1, se["conv2"], (3, 3, 3), 1, 1,
                        slope=LRELU_SLOPE, out_dtype=MATMUL_DTYPE,
                        fused_tail={"res": h.reshape(C, M),
                                    "bn_scale": bp["bn_scale"],
                                    "bn_shift": bp["bn_shift"]})
        return out

    # C = 16: the gate depends on conv2's output -> conv2 + bn2, then pool/FCs,
    # then the fused elementwise tail kernel.
    h2 = conv3d_cn(h1, se["conv2"], (3, 3, 3), 1, 1,
                   slope=1.0, out_dtype=MATMUL_DTYPE)
    S = D * H * W
    # TODO(synk): fuse this global-average pool into the conv2 GEMM epilogue
    # (per-(c,n) partial sums in VMEM scratch) to save one full read of h2.
    pooled = jnp.mean(h2.reshape(C, N, S).astype(jnp.float32), axis=-1)      # (C, N)
    hid = jnp.maximum(pooled.T @ se["fc1_w"].T + se["fc1_b"], 0.0)           # (N, hid)
    gate = jax.nn.sigmoid(hid @ se["fc2_w"].T + se["fc2_b"]).T               # (C, N)

    R = C * N
    out2d = se_tail(
        h2.reshape(R, S),
        gate.reshape(R, 1).astype(jnp.float32),
        h.reshape(R, S),
        jnp.broadcast_to(bp["bn_scale"], (C, N)).reshape(R, 1),
        jnp.broadcast_to(bp["bn_shift"], (C, N)).reshape(R, 1),
        out_dtype=MATMUL_DTYPE)
    return out2d.reshape(C, N, D, H, W)


def svs_encoder_ver2_forward(x, pp):
    """x: (N, 1, D, H, W) NCDHW -> (N, 1, Do, Ho, Wo) float32."""
    h = jnp.transpose(x, (1, 0, 2, 3, 4))                 # -> (C, N, D, H, W), once
    h = block_with_se(h, pp["block1"], (7, 7, 7), 2, 3)   # 1 -> 4
    h = block_with_se(h, pp["block2"], (4, 4, 4), 2, 1)   # 4 -> 8
    h = block_with_se(h, pp["block3"], (3, 3, 3), 1, 1)   # 8 -> 16
    h = conv3d_cn(h, pp["block4"]["conv"], (1, 1, 1), 1, 0,
                  slope=LRELU_SLOPE, out_dtype=jnp.float32)  # 16 -> 1 (+BN+LReLU)
    return jnp.transpose(h, (1, 0, 2, 3, 4))               # back to NCDHW, once


# -----------------------------------------------------------------------------
# One-time parameter preparation (hoisted out of the per-call hot path)
# -----------------------------------------------------------------------------
def prepare_params(params):
    """Fold eval-mode BN (PyTorch-init running stats: mean=0, var=1) and the
    conv bias into (scaled weights, shift); flatten weights to (Cout, K) bf16;
    fold the input-independent SE gate (C in {4, 8}) into conv2."""

    def prep_conv(w, b, scale=None, post_shift=None):
        # y = scale * (w @ p + b) + post_shift = (scale*w) @ p + (scale*b + post_shift)
        cout = w.shape[0]
        if scale is None:
            scale = jnp.ones((cout,), jnp.float32)
        if post_shift is None:
            post_shift = jnp.zeros((cout,), jnp.float32)
        w_scaled = (w * scale.reshape(cout, 1, 1, 1, 1)).reshape(cout, -1)
        return {
            "w": w_scaled.astype(MATMUL_DTYPE),
            "shift": (b * scale + post_shift).reshape(cout, 1).astype(jnp.float32),
        }

    def prep_block(bp):
        se = bp["se"]
        hid = se["fc1_w"].shape[0]
        s1 = se["bn1_gamma"] / jnp.sqrt(1.0 + BN_EPS)
        s2 = se["bn2_gamma"] / jnp.sqrt(1.0 + BN_EPS)
        se_p = {"conv1": prep_conv(se["conv1_w"], se["conv1_b"], s1, se["bn1_beta"])}
        if hid == 0:
            # nn.Linear(C, 0) -> nn.Linear(0, C): gate = sigmoid(fc2_bias),
            # input independent -> fold it straight into conv2 (with bn2).
            gate = jax.nn.sigmoid(se["fc2_b"])
            se_p["conv2"] = prep_conv(se["conv2_w"], se["conv2_b"],
                                      gate * s2, gate * se["bn2_beta"])
        else:
            se_p["conv2"] = prep_conv(se["conv2_w"], se["conv2_b"], s2, se["bn2_beta"])
            se_p.update(fc1_w=se["fc1_w"], fc1_b=se["fc1_b"],
                        fc2_w=se["fc2_w"], fc2_b=se["fc2_b"])
        cout = bp["bn_gamma"].shape[0]
        return {
            "conv": prep_conv(bp["conv_w"], bp["conv_b"]),
            "se": se_p,
            "bn_scale": (bp["bn_gamma"] / jnp.sqrt(1.0 + BN_EPS))
                        .reshape(cout, 1).astype(jnp.float32),
            "bn_shift": bp["bn_beta"].reshape(cout, 1).astype(jnp.float32),
        }

    b4 = params["block4"]
    return {
        "block1": prep_block(params["block1"]),
        "block2": prep_block(params["block2"]),
        "block3": prep_block(params["block3"]),
        "block4": {"conv": prep_conv(b4["conv_w"], b4["conv_b"],
                                     b4["bn_gamma"] / jnp.sqrt(1.0 + BN_EPS),
                                     b4["bn_beta"])},
    }


# -----------------------------------------------------------------------------
# Deterministic parameter init (shapes from SVSEncoder_ver2.__init__)
# -----------------------------------------------------------------------------
def init_params(key):
    keys = iter(jax.random.split(key, 128))

    def nrm(shape, std=0.05):
        return (jax.random.normal(next(keys), shape, jnp.float32) * std
                if 0 not in shape else jnp.zeros(shape, jnp.float32))

    def uni(shape, lo=0.8, hi=1.2):
        return jax.random.uniform(next(keys), shape, jnp.float32, lo, hi)

    def se_params(C):
        hid = C // 16  # reduction=16 -> 0 for C in {4, 8}, 1 for C=16
        return {
            "conv1_w": nrm((C, C, 3, 3, 3)), "conv1_b": nrm((C,), 0.01),
            "bn1_gamma": uni((C,)), "bn1_beta": nrm((C,), 0.01),
            "conv2_w": nrm((C, C, 3, 3, 3)), "conv2_b": nrm((C,), 0.01),
            "bn2_gamma": uni((C,)), "bn2_beta": nrm((C,), 0.01),
            "fc1_w": nrm((hid, C)), "fc1_b": nrm((hid,), 0.01),
            "fc2_w": nrm((C, hid)), "fc2_b": nrm((C,), 0.01),
        }

    def block(Cin, Cout, k):
        return {
            "conv_w": nrm((Cout, Cin, k, k, k)), "conv_b": nrm((Cout,), 0.01),
            "se": se_params(Cout),
            "bn_gamma": uni((Cout,)), "bn_beta": nrm((Cout,), 0.01),
        }

    return {
        "block1": block(1, 4, 7),
        "block2": block(4, 8, 4),
        "block3": block(8, 16, 3),
        "block4": {
            "conv_w": nrm((1, 16, 1, 1, 1)), "conv_b": nrm((1,), 0.01),
            "bn_gamma": uni((1,)), "bn_beta": nrm((1,), 0.01),
        },
    }


# -----------------------------------------------------------------------------
# Small numeric self-check: im2col K ordering vs lax.conv_general_dilated
# -----------------------------------------------------------------------------
def _check_conv_correctness():
    k1, k2, k3 = jax.random.split(jax.random.PRNGKey(42), 3)
    Cin, Cout, D = 3, 4, 9
    x = jax.random.normal(k1, (1, Cin, D, D, D), jnp.float32)
    w = jax.random.normal(k2, (Cout, Cin, 3, 3, 3), jnp.float32) * 0.1
    b = jax.random.normal(k3, (Cout,), jnp.float32) * 0.1
    cp = {"w": w.reshape(Cout, -1).astype(MATMUL_DTYPE),
          "shift": b.reshape(Cout, 1)}
    got = conv3d_cn(jnp.transpose(x, (1, 0, 2, 3, 4)), cp, (3, 3, 3), 2, 1,
                    slope=1.0, out_dtype=jnp.float32)
    got = jnp.transpose(got, (1, 0, 2, 3, 4))
    ref = jax.lax.conv_general_dilated(
        x.astype(MATMUL_DTYPE), w.astype(MATMUL_DTYPE),
        window_strides=(2, 2, 2), padding=((1, 1),) * 3,
        dimension_numbers=("NCDHW", "OIDHW", "NCDHW"),
        preferred_element_type=jnp.float32) + b.reshape(1, Cout, 1, 1, 1)
    assert jnp.allclose(got, ref, atol=1e-2, rtol=1e-2), "im2col K-order mismatch"


# -----------------------------------------------------------------------------
if __name__ == "__main__":
    _check_conv_correctness()   # guards the (cin, kd, kh, kw) patch ordering

    key = jax.random.PRNGKey(0)
    k_param, k_x = jax.random.split(key)
    params = init_params(k_param)
    pp = prepare_params(params)   # one-time weight flatten / BN & gate folding

    # small input consistent with the module: NCDHW, single input channel
    x = jax.random.normal(k_x, (2, 1, 16, 16, 16), jnp.float32)

    fwd = jax.jit(svs_encoder_ver2_forward)
    out = jax.block_until_ready(fwd(x, pp))

    assert out.shape == (2, 1, 4, 4, 4), out.shape
    assert out.dtype == jnp.float32
    assert bool(jnp.all(jnp.isfinite(out)))
    print("KERNEL_OK")
</pallas_src>

<mosaic_0001>
module attributes {stable_mosaic.version = 11 : i64} {
  func.func @_conv_affine_kernel(%arg0: i32, %arg1: memref<4x81xbf16, #tpu.memory_space<vmem>>, %arg2: memref<81x128xbf16, #tpu.memory_space<vmem>>, %arg3: memref<4x1xf32, #tpu.memory_space<vmem>>, %arg4: memref<4x128xf32, #tpu.memory_space<vmem>>) attributes {dimension_semantics = [#tpu.dimension_semantics<parallel>], iteration_bounds = array<i64: 1>, scalar_prefetch = 0 : i64, scratch_operands = 0 : i64, tpu.core_type = #tpu.core_type<tc>, window_params = [{pipeline_mode = #tpu.pipeline_mode<synchronous>, transform_indices = @transform_0, window_bounds = array<i64: 4, 81>}, {transform_indices = @transform_1, window_bounds = array<i64: 81, 128>}, {pipeline_mode = #tpu.pipeline_mode<synchronous>, transform_indices = @transform_2, window_bounds = array<i64: 4, 1>}, {transform_indices = @transform_3, window_bounds = array<i64: 4, 128>}]} {
    %c0 = arith.constant 0 : index
    %c0_0 = arith.constant 0 : index
    %0 = vector.load %arg1[%c0, %c0_0] : memref<4x81xbf16, #tpu.memory_space<vmem>>, vector<4x81xbf16>
    %c0_1 = arith.constant 0 : index
    %c0_2 = arith.constant 0 : index
    %1 = vector.load %arg2[%c0_1, %c0_2] : memref<81x128xbf16, #tpu.memory_space<vmem>>, vector<81x128xbf16>
    %cst = arith.constant dense<0.000000e+00> : vector<4x128xf32>
    %2 = tpu.matmul %0, %1, %cst {dimension_numbers = #tpu.dot_dimension_numbers<[1], [0], [0], [1], [0, 0, 1, 1], [], []>} : vector<4x81xbf16>, vector<81x128xbf16>, vector<4x128xf32> -> vector<4x128xf32>
    %c0_3 = arith.constant 0 : index
    %c0_4 = arith.constant 0 : index
    %3 = vector.load %arg3[%c0_3, %c0_4] : memref<4x1xf32, #tpu.memory_space<vmem>>, vector<4x1xf32>
    %4 = vector.broadcast %3 : vector<4x1xf32> to vector<4x128xf32>
    %5 = arith.addf %2, %4 : vector<4x128xf32>
    %c0_5 = arith.constant 0 : index
    %c0_6 = arith.constant 0 : index
    %6 = vector.load %arg4[%c0_5, %c0_6] : memref<4x128xf32, #tpu.memory_space<vmem>>, vector<4x128xf32>
    tpu.vector_store %arg4[%c0_5, %c0_6], %5 {strides = array<i32>} : memref<4x128xf32, #tpu.memory_space<vmem>>, vector<4x128xf32>,
    return
  }
  func.func @transform_0(%arg0: i32) -> (i32, i32) {
    %c0_i32 = arith.constant 0 : i32
    %c0_i32_0 = arith.constant 0 : i32
    %c0_i32_1 = arith.constant 0 : i32
    return %c0_i32, %c0_i32_0 : i32, i32
  }
  func.func @transform_1(%arg0: i32) -> (i32, i32) {
    %c0_i32 = arith.constant 0 : i32
    %c0_i32_0 = arith.constant 0 : i32
    return %c0_i32, %arg0 : i32, i32
  }
  func.func @transform_2(%arg0: i32) -> (i32, i32) {
    %c0_i32 = arith.constant 0 : i32
    %c0_i32_0 = arith.constant 0 : i32
    %c0_i32_1 = arith.constant 0 : i32
    return %c0_i32, %c0_i32_0 : i32, i32
  }
  func.func @transform_3(%arg0: i32) -> (i32, i32) {
    %c0_i32 = arith.constant 0 : i32
    %c0_i32_0 = arith.constant 0 : i32
    return %c0_i32, %arg0 : i32, i32
  }
}

</mosaic_0001>

<llo_original>
// kernel: tpu_custom_call.1
$region0: #{tpu_custom_call.1}
  #allocation0 [shape = 'u32[]', space=smem, size = 0x4, offset = 0x4, fixed_abs, tag = 'smem constant byte address 0x4 - core index']
  #allocation1 [shape = 'u32[72,128]{1,0:T(1,128)}', space=vmem, size = 0x9000, scoped, tag = 'internal scratch']
  %s0 = inlined_call_operand.vmem [shape: bf16[4,81], index: 0, kind: input, shape index: {}]
  %s1 = inlined_call_operand.hbm [shape: bf16[81,128], index: 1, kind: input, shape index: {}]
  %s2 = inlined_call_operand.vmem [shape: f32[4,1], index: 2, kind: input, shape index: {}]
  %s3 = inlined_call_operand.hbm [shape: f32[4,128], index: 3, kind: output, shape index: {}]
  %s4 = sld [smem:[#allocation0]]
  $region26: #{tpu_custom_call.1} parent=0
    _
  %s6 = ssub.s32 1, %s4
  %s7 = scalar_select 0, %s6, %s4
  $region1: #{tpu_custom_call.1} parent=0
    #allocation2 [shape = 'u8[22528]{0}', space=vmem, size = 0x5800, scoped, tag = 'input window, operand 1, single buffered']
    #allocation3 [shape = 's32[1]{0}', space=sflag, size = 0x4, scoped, tag = 'scoped memory for tpu_custom_call.1']
    #allocation4 [shape = 's32[1]{0}', space=sflag, size = 0x4, scoped, tag = 'scoped memory for tpu_custom_call.1']
    #allocation5 [shape = 'u8[2048]{0}', space=vmem, size = 0x800, scoped, tag = 'output window, operand 0, single buffered']
    %8 = vsyncpa [#allocation3], 0
    %9 = vsyncpa [#allocation4], 0
    // Predicated region
    $region2: #{tpu_custom_call.1} parent=1 // pred_check
      _
    $region3: #{tpu_custom_call.1} parent=1 // pred_check_branch
      %11 = sbr.rel (0) target = $region5
    $region4: #{tpu_custom_call.1} parent=1 // pred_region
      _
    $region5: #{tpu_custom_call.1} parent=1 // pred_fallthru
      _
    // Predicated region
    $region6: #{tpu_custom_call.1} parent=1 // pred_check
      _
    $region7: #{tpu_custom_call.1} parent=1 // pred_check_branch
      %13 = sbr.rel (0) target = $region9
    $region8: #{tpu_custom_call.1} parent=1 // pred_region
      %15 = vsyncadd [#allocation3], 0
      %s16 = sshll.u32 %s1, 4
      %s17 = int_to_ptr.hbm [resolvable:$true] %s16
      %s18 = sshll.u32 [#allocation2], 4
      %s19 = int_to_ptr.vmem [resolvable:$true] %s18
      %24 = dma.hbm_to_vmem [thread:$0]  %s17, 704, %s19, [#allocation3], 64, 64, 4
    $region9: #{tpu_custom_call.1} parent=1 // pred_fallthru
      _
    // Predicated region
    $region10: #{tpu_custom_call.1} parent=1 // pred_check
      _
    $region11: #{tpu_custom_call.1} parent=1 // pred_check_branch
      %26 = sbr.rel (0) target = $region13
    $region12: #{tpu_custom_call.1} parent=1 // pred_region
      _
    $region13: #{tpu_custom_call.1} parent=1 // pred_fallthru
      _
    // Predicated region
    $region14: #{tpu_custom_call.1} parent=1 // pred_check
      _
    $region15: #{tpu_custom_call.1} parent=1 // pred_check_branch
      %28 = sbr.rel (0) target = $region17
    $region16: #{tpu_custom_call.1} parent=1 // pred_region
      %30 = dma.done [#allocation3], 704
    $region17: #{tpu_custom_call.1} parent=1 // pred_fallthru
      _
    %v32 = vld [vmem:[%s0] sm:$0x3]
    %v33 = vld [vmem:[#allocation2] sm:$0xf]
    %v34 = vld [vmem:[#allocation2 + $0x4] sm:$0xf]
    %v35 = vld [vmem:[#allocation2 + $0x8] sm:$0xf]
    %v36 = vld [vmem:[#allocation2 + $0xc] sm:$0xf]
    %v37 = vld [vmem:[#allocation2 + $0x10] sm:$0xf]
    %v38 = vld [vmem:[#allocation2 + $0x14] sm:$0xf]
    %v39 = vld [vmem:[#allocation2 + $0x18] sm:$0xf]
    %v40 = vld [vmem:[#allocation2 + $0x1c] sm:$0xf]
    %v41 = vld [vmem:[#allocation2 + $0x20] sm:$0xf]
    %v42 = vld [vmem:[#allocation2 + $0x24] sm:$0xf]
    %v43 = vld [vmem:[#allocation2 + $0x28] sm:$0x1]
    %v44 = vld [vmem:[%s2] sm:$0xf]
    %46 = vset.pattern.permute.xlu0 0
    %47 = vperm.xlu0 %46, %v44
    %v48 = vpop.permute.xlu0 %47
    %v61 = vunpack.c.l.b16 %v33
    %v62 = vunpack.c.l.b16 %v34
    %v63 = vunpack.c.l.b16 %v35
    %v64 = vunpack.c.l.b16 %v36
    %v65 = vunpack.c.l.b16 %v37
    %v66 = vunpack.c.l.b16 %v38
    %v67 = vunpack.c.l.b16 %v39
    %v68 = vunpack.c.l.b16 %v40
    %v69 = vunpack.c.l.b16 %v41
    %v70 = vunpack.c.l.b16 %v42
    %v71 = vunpack.c.l.b16 %v43
    %v72 = vpack.c.b16 %v62, %v61
    %v73 = vpack.c.b16 %v64, %v63
    %v74 = vpack.c.b16 %v66, %v65
    %v75 = vpack.c.b16 %v68, %v67
    %v76 = vpack.c.b16 %v70, %v69
    %v77 = vpack.c.b16 %v71, %v71
    %vm83 = vcmask 662528
    %v85 = vsel %vm83, %v32, 0
    %vm87 = vcmask 1040384
    %v88 = vsel 0, 4294967295, 65535
    %v89 = vsel %vm87, %v88, 0
    %v91 = vand.u32 %v77, %v89
    %93 = vmatpush.bf16.msra.mxu0 0
    %94 = vmatpush.bf16.msra.mxu0 0
    %95 = vmatpush.bf16.msra.mxu0 %v91
    %96 = vmatpush.bf16.msra.mxu0 %v76
    %97 = vmatpush.bf16.msra.mxu0 %v75
    %98 = vmatpush.bf16.msra.mxu0 %v74
    %99 = vmatpush.bf16.msra.mxu0 %v73
    %100 = vmatpush.bf16.msra.mxu0 %v72
    %101 = vmatmul.bf16.gmra.mxu0 %v85
    %v102 = vpop.f32.mrf.mxu0
    %v103 = vadd.f32 %v48, %v102
    %v104 = vpop.f32.mrf.mxu0
    %105 = vdwg.mxu0
    %106 = vst [vmem:[#allocation5] sm:$0xf] %v103
    // Predicated region
    $region18: #{tpu_custom_call.1} parent=1 // pred_check
      _
    $region19: #{tpu_custom_call.1} parent=1 // pred_check_branch
      %108 = sbr.rel (0) target = $region21
    $region20: #{tpu_custom_call.1} parent=1 // pred_region
      %110 = vsyncadd [#allocation4], 0
      %s112 = sshll.u32 [#allocation5], 4
      %s113 = int_to_ptr.vmem [resolvable:$true] %s112
      %s114 = sshll.u32 %s3, 4
      %s115 = int_to_ptr.hbm [resolvable:$true] %s114
      %117 = dma.vmem_to_hbm [thread:$0]  %s113, 64, %s115, [#allocation4]
    $region21: #{tpu_custom_call.1} parent=1 // pred_fallthru
      _
    // Predicated region
    $region22: #{tpu_custom_call.1} parent=1 // pred_check
      _
    $region23: #{tpu_custom_call.1} parent=1 // pred_check_branch
      %119 = sbr.rel (0) target = $region25
    $region24: #{tpu_custom_call.1} parent=1 // pred_region
      %121 = dma.done [#allocation4], 64
    $region25: #{tpu_custom_call.1} parent=1 // pred_fallthru
      _
    %122 = vsyncpa [#allocation3], 1
    %123 = vsyncpa [#allocation4], 1

</llo_original>
